<compile_context>
chip_gen: v6e
topology: v6e:2x2x1
jax: 0.10.0
libtpu: 0.0.40
codegen_flags: <defaults>
</compile_context>

<pallas_src>
import functools

import jax
import jax.numpy as jnp
from jax.experimental import pallas as pl
from jax.experimental.pallas import tpu as pltpu

HIDDEN = 64      # hidden width of layer1/layer2 (from the PyTorch module)
STATE_PAD = 8    # state_size padded to a full sublane group
ACT_PAD = 8      # action head padded to a full sublane group


def _mlp_kernel(xT_ref, w1_ref, w2_ref, w3_ref, b_ref, outT_ref):
    """Transposed MLP: batch lives on the lane axis of every operand."""
    xT = xT_ref[...]                       # (STATE_PAD, tile_b)
    b = b_ref[...]                         # (HIDDEN, 3) packed bias columns
    b1 = b[:, 0:1]                         # (HIDDEN, 1) -> lane-broadcast
    b2 = b[:, 1:2]
    b3 = b[:ACT_PAD, 2:3]                  # (ACT_PAD, 1)

    # layer1 + ReLU: (HIDDEN, STATE_PAD) @ (STATE_PAD, tile_b)
    h1 = jnp.dot(w1_ref[...], xT, preferred_element_type=jnp.float32)
    h1 = jnp.maximum(h1 + b1, 0.0)
    # layer2 + ReLU: (HIDDEN, HIDDEN) @ (HIDDEN, tile_b)
    h2 = jnp.dot(w2_ref[...], h1, preferred_element_type=jnp.float32)
    h2 = jnp.maximum(h2 + b2, 0.0)
    # layer3 head: (ACT_PAD, HIDDEN) @ (HIDDEN, tile_b) -> lane-dense (8, tile_b)
    out = jnp.dot(w3_ref[...], h2, preferred_element_type=jnp.float32)
    outT_ref[...] = (out + b3).astype(outT_ref.dtype)


def pack_params(params):
    """Repack params for the transposed kernel.

    Incoming layout (matching the pure-JAX reference): w_i is (in, out),
    b_i is (1, out).  Kernel layout: native PyTorch (out, in) weights with the
    state / action dims zero-padded to 8 sublanes, biases packed as columns of
    a single (HIDDEN, 3) array (one DMA).
    """
    w1, b1, w2, b2, w3, b3, log_std = params
    state_size, hidden = w1.shape
    action_size = w3.shape[1]
    assert hidden == HIDDEN and state_size <= STATE_PAD and action_size <= ACT_PAD

    w1t = jnp.zeros((HIDDEN, STATE_PAD), jnp.float32).at[:, :state_size].set(w1.T)
    w2t = jnp.asarray(w2.T, jnp.float32)                                  # (64, 64)
    w3t = jnp.zeros((ACT_PAD, HIDDEN), jnp.float32).at[:action_size, :].set(w3.T)
    b = jnp.zeros((HIDDEN, 3), jnp.float32)
    b = b.at[:, 0].set(b1.reshape(-1))
    b = b.at[:, 1].set(b2.reshape(-1))
    b = b.at[:action_size, 2].set(b3.reshape(-1))
    return {
        "w1": w1t, "w2": w2t, "w3": w3t, "b": b,
        "log_std": log_std, "state_size": state_size, "action_size": action_size,
    }


def _choose_tile_b(batch):
    """Lane-tile over the batch.

    batch <= 128: single block equal to the full lane dim (legal block shape).
    batch  > 128: multiple of 128 lanes, sized for >= 2 grid steps (so v7x's
    two TensorCores both get work), capped at 1024 lanes per step.
    """
    if batch <= 128:
        return batch
    half = -(-batch // 2)            # cdiv(batch, 2)
    tile = -(-half // 128) * 128     # round up to a lane multiple
    return min(1024, tile)


@functools.partial(jax.jit, static_argnames=("state_size", "action_size"))
def _net_forward_impl(x, w1, w2, w3, b, log_std, *, state_size, action_size):
    batch = x.shape[0]
    tile_b = _choose_tile_b(batch)
    grid = (pl.cdiv(batch, tile_b),)

    # x^T with the feature dim zero-padded to 8 sublanes (fuses under jit).
    xT = jnp.pad(x.astype(jnp.float32).T, ((0, STATE_PAD - state_size), (0, 0)))

    outT = pl.pallas_call(
        _mlp_kernel,
        out_shape=jax.ShapeDtypeStruct((ACT_PAD, batch), jnp.float32),
        grid=grid,
        in_specs=[
            pl.BlockSpec((STATE_PAD, tile_b), lambda i: (0, i)),   # x^T streams
            pl.BlockSpec((HIDDEN, STATE_PAD), lambda i: (0, 0)),   # W1 resident
            pl.BlockSpec((HIDDEN, HIDDEN), lambda i: (0, 0)),      # W2 resident
            pl.BlockSpec((ACT_PAD, HIDDEN), lambda i: (0, 0)),     # W3 resident
            pl.BlockSpec((HIDDEN, 3), lambda i: (0, 0)),           # packed biases
        ],
        out_specs=pl.BlockSpec((ACT_PAD, tile_b), lambda i: (0, i)),
        compiler_params=pltpu.CompilerParams(
            dimension_semantics=("parallel",)),  # batch blocks are independent
    )(xT, w1, w2, w3, b)

    mean_action = outT[:action_size, :].T            # (batch, action_size)
    # log_std = nn.Parameter(ones(action_size)*0): input-independent passthrough.
    return mean_action, log_std


def net_forward(x, packed):
    """Pallas equivalent of Net.forward. Returns (mean_action, log_std)."""
    return _net_forward_impl(
        x, packed["w1"], packed["w2"], packed["w3"], packed["b"],
        packed["log_std"],
        state_size=packed["state_size"], action_size=packed["action_size"])


def init_params(key, state_size, action_size, hidden=HIDDEN):
    """Deterministic init mimicking nn.Linear default (uniform +-1/sqrt(fan_in))."""
    ks = jax.random.split(key, 6)

    def linear(kw, kb, fan_in, fan_out):
        bound = 1.0 / jnp.sqrt(jnp.float32(fan_in))
        w = jax.random.uniform(kw, (fan_in, fan_out), jnp.float32, -bound, bound)
        b = jax.random.uniform(kb, (1, fan_out), jnp.float32, -bound, bound)
        return w, b

    w1, b1 = linear(ks[0], ks[1], state_size, hidden)
    w2, b2 = linear(ks[2], ks[3], hidden, hidden)
    w3, b3 = linear(ks[4], ks[5], hidden, action_size)
    log_std = jnp.zeros((action_size,), jnp.float32)  # param1 = ones(action_size)*0
    return (w1, b1, w2, b2, w3, b3, log_std)


def net_forward_ref(x, params):
    """Pure-JAX reference for correctness check."""
    w1, b1, w2, b2, w3, b3, log_std = params
    h1 = jnp.maximum(x @ w1 + b1, 0.0)
    h2 = jnp.maximum(h1 @ w2 + b2, 0.0)
    return h2 @ w3 + b3, log_std


if __name__ == "__main__":
    # Pendulum-v1: state_size=3, action_size=1.
    state_size, action_size = 3, 1

    key = jax.random.PRNGKey(0)
    k_params, k_x1, k_x2, k_x3 = jax.random.split(key, 4)
    params = init_params(k_params, state_size, action_size)
    packed = pack_params(params)

    # Small per-env-step batch (grid=(1,), block equals full lane dim).
    x_small = jax.random.normal(k_x1, (8, state_size), jnp.float32)
    mean_s, log_std_s = net_forward(x_small, packed)
    mean_s = jax.block_until_ready(mean_s)
    ref_s, ref_log_std = net_forward_ref(x_small, params)
    assert mean_s.shape == (8, action_size)
    assert log_std_s.shape == (action_size,)
    assert jnp.allclose(mean_s, ref_s, atol=1e-5, rtol=1e-5)
    assert jnp.allclose(log_std_s, ref_log_std)

    # Mid-size batch: tile_b=256, grid=(2,), masked partial last block.
    x_mid = jax.random.normal(k_x3, (300, state_size), jnp.float32)
    mean_m, _ = net_forward(x_mid, packed)
    mean_m = jax.block_until_ready(mean_m)
    ref_m, _ = net_forward_ref(x_mid, params)
    assert mean_m.shape == (300, action_size)
    assert jnp.allclose(mean_m, ref_m, atol=1e-5, rtol=1e-5)

    # Larger ragged batch: tile_b=640, grid=(2,), exercises the cdiv grid path.
    x_big = jax.random.normal(k_x2, (1037, state_size), jnp.float32)
    mean_b, _ = net_forward(x_big, packed)
    mean_b = jax.block_until_ready(mean_b)
    ref_b, _ = net_forward_ref(x_big, params)
    assert mean_b.shape == (1037, action_size)
    assert jnp.allclose(mean_b, ref_b, atol=1e-5, rtol=1e-5)

    print("KERNEL_OK")
</pallas_src>

<mosaic_0001>
module attributes {stable_mosaic.version = 11 : i64} {
  func.func @_mlp_kernel(%arg0: i32, %arg1: memref<8x8xf32, #tpu.memory_space<vmem>>, %arg2: memref<64x8xf32, #tpu.memory_space<vmem>>, %arg3: memref<64x64xf32, #tpu.memory_space<vmem>>, %arg4: memref<8x64xf32, #tpu.memory_space<vmem>>, %arg5: memref<64x3xf32, #tpu.memory_space<vmem>>, %arg6: memref<8x8xf32, #tpu.memory_space<vmem>>) attributes {dimension_semantics = [#tpu.dimension_semantics<parallel>], iteration_bounds = array<i64: 1>, scalar_prefetch = 0 : i64, scratch_operands = 0 : i64, tpu.core_type = #tpu.core_type<tc>, window_params = [{transform_indices = @transform_0, window_bounds = array<i64: 8, 8>}, {pipeline_mode = #tpu.pipeline_mode<synchronous>, transform_indices = @transform_1, window_bounds = array<i64: 64, 8>}, {pipeline_mode = #tpu.pipeline_mode<synchronous>, transform_indices = @transform_2, window_bounds = array<i64: 64, 64>}, {pipeline_mode = #tpu.pipeline_mode<synchronous>, transform_indices = @transform_3, window_bounds = array<i64: 8, 64>}, {pipeline_mode = #tpu.pipeline_mode<synchronous>, transform_indices = @transform_4, window_bounds = array<i64: 64, 3>}, {transform_indices = @transform_5, window_bounds = array<i64: 8, 8>}]} {
    %c0 = arith.constant 0 : index
    %c0_0 = arith.constant 0 : index
    %0 = vector.load %arg1[%c0, %c0_0] : memref<8x8xf32, #tpu.memory_space<vmem>>, vector<8x8xf32>
    %c0_1 = arith.constant 0 : index
    %c0_2 = arith.constant 0 : index
    %1 = vector.load %arg5[%c0_1, %c0_2] : memref<64x3xf32, #tpu.memory_space<vmem>>, vector<64x3xf32>
    %2 = vector.extract_strided_slice %1 {offsets = [0, 0], sizes = [64, 1], strides = [1, 1]} : vector<64x3xf32> to vector<64x1xf32>
    %3 = vector.extract_strided_slice %1 {offsets = [0, 1], sizes = [64, 1], strides = [1, 1]} : vector<64x3xf32> to vector<64x1xf32>
    %4 = vector.extract_strided_slice %1 {offsets = [0, 2], sizes = [8, 1], strides = [1, 1]} : vector<64x3xf32> to vector<8x1xf32>
    %c0_3 = arith.constant 0 : index
    %c0_4 = arith.constant 0 : index
    %5 = vector.load %arg2[%c0_3, %c0_4] : memref<64x8xf32, #tpu.memory_space<vmem>>, vector<64x8xf32>
    %cst = arith.constant dense<0.000000e+00> : vector<64x8xf32>
    %6 = tpu.matmul %5, %0, %cst {dimension_numbers = #tpu.dot_dimension_numbers<[1], [0], [0], [1], [0, 0, 1, 1], [], []>} : vector<64x8xf32>, vector<8x8xf32>, vector<64x8xf32> -> vector<64x8xf32>
    %7 = vector.broadcast %2 : vector<64x1xf32> to vector<64x8xf32>
    %8 = arith.addf %6, %7 : vector<64x8xf32>
    %cst_5 = arith.constant 0.000000e+00 : f32
    %9 = vector.broadcast %cst_5 : f32 to vector<64x8xf32>
    %10 = arith.maximumf %8, %9 : vector<64x8xf32>
    %c0_6 = arith.constant 0 : index
    %c0_7 = arith.constant 0 : index
    %11 = vector.load %arg3[%c0_6, %c0_7] : memref<64x64xf32, #tpu.memory_space<vmem>>, vector<64x64xf32>
    %cst_8 = arith.constant dense<0.000000e+00> : vector<64x8xf32>
    %12 = tpu.matmul %11, %10, %cst_8 {dimension_numbers = #tpu.dot_dimension_numbers<[1], [0], [0], [1], [0, 0, 1, 1], [], []>} : vector<64x64xf32>, vector<64x8xf32>, vector<64x8xf32> -> vector<64x8xf32>
    %13 = vector.broadcast %3 : vector<64x1xf32> to vector<64x8xf32>
    %14 = arith.addf %12, %13 : vector<64x8xf32>
    %cst_9 = arith.constant 0.000000e+00 : f32
    %15 = vector.broadcast %cst_9 : f32 to vector<64x8xf32>
    %16 = arith.maximumf %14, %15 : vector<64x8xf32>
    %c0_10 = arith.constant 0 : index
    %c0_11 = arith.constant 0 : index
    %17 = vector.load %arg4[%c0_10, %c0_11] : memref<8x64xf32, #tpu.memory_space<vmem>>, vector<8x64xf32>
    %cst_12 = arith.constant dense<0.000000e+00> : vector<8x8xf32>
    %18 = tpu.matmul %17, %16, %cst_12 {dimension_numbers = #tpu.dot_dimension_numbers<[1], [0], [0], [1], [0, 0, 1, 1], [], []>} : vector<8x64xf32>, vector<64x8xf32>, vector<8x8xf32> -> vector<8x8xf32>
    %19 = vector.broadcast %4 : vector<8x1xf32> to vector<8x8xf32>
    %20 = arith.addf %18, %19 : vector<8x8xf32>
    %c0_13 = arith.constant 0 : index
    %c0_14 = arith.constant 0 : index
    %21 = vector.load %arg6[%c0_13, %c0_14] : memref<8x8xf32, #tpu.memory_space<vmem>>, vector<8x8xf32>
    tpu.vector_store %arg6[%c0_13, %c0_14], %20 {strides = array<i32>} : memref<8x8xf32, #tpu.memory_space<vmem>>, vector<8x8xf32>,
    return
  }
  func.func @transform_0(%arg0: i32) -> (i32, i32) {
    %c0_i32 = arith.constant 0 : i32
    %c0_i32_0 = arith.constant 0 : i32
    return %c0_i32, %arg0 : i32, i32
  }
  func.func @transform_1(%arg0: i32) -> (i32, i32) {
    %c0_i32 = arith.constant 0 : i32
    %c0_i32_0 = arith.constant 0 : i32
    %c0_i32_1 = arith.constant 0 : i32
    return %c0_i32, %c0_i32_0 : i32, i32
  }
  func.func @transform_2(%arg0: i32) -> (i32, i32) {
    %c0_i32 = arith.constant 0 : i32
    %c0_i32_0 = arith.constant 0 : i32
    %c0_i32_1 = arith.constant 0 : i32
    return %c0_i32, %c0_i32_0 : i32, i32
  }
  func.func @transform_3(%arg0: i32) -> (i32, i32) {
    %c0_i32 = arith.constant 0 : i32
    %c0_i32_0 = arith.constant 0 : i32
    %c0_i32_1 = arith.constant 0 : i32
    return %c0_i32, %c0_i32_0 : i32, i32
  }
  func.func @transform_4(%arg0: i32) -> (i32, i32) {
    %c0_i32 = arith.constant 0 : i32
    %c0_i32_0 = arith.constant 0 : i32
    %c0_i32_1 = arith.constant 0 : i32
    return %c0_i32, %c0_i32_0 : i32, i32
  }
  func.func @transform_5(%arg0: i32) -> (i32, i32) {
    %c0_i32 = arith.constant 0 : i32
    %c0_i32_0 = arith.constant 0 : i32
    return %c0_i32, %arg0 : i32, i32
  }
}

</mosaic_0001>

<llo_original>
// kernel: _net_forward_impl.1
$region0: #{_net_forward_impl.1}
  #allocation0 [shape = 'u32[]', space=smem, size = 0x4, offset = 0x4, fixed_abs, tag = 'smem constant byte address 0x4 - core index']
  #allocation1 [shape = 'u32[144,128]{1,0:T(1,128)}', space=vmem, size = 0x12000, scoped, tag = 'internal scratch']
  %s0 = inlined_call_operand.vmem [shape: f32[8,8], index: 0, kind: input, shape index: {}]
  %s1 = inlined_call_operand.vmem [shape: f32[64,8], index: 1, kind: input, shape index: {}]
  %s2 = inlined_call_operand.vmem [shape: f32[64,64], index: 2, kind: input, shape index: {}]
  %s3 = inlined_call_operand.vmem [shape: f32[8,64], index: 3, kind: input, shape index: {}]
  %s4 = inlined_call_operand.vmem [shape: f32[64,3], index: 4, kind: input, shape index: {}]
  %s5 = inlined_call_operand.vmem [shape: f32[8,8], index: 5, kind: output, shape index: {}]
  %s6 = sld [smem:[#allocation0]]
  $region30: #{_net_forward_impl.1} parent=0
    _
  %s8 = ssub.s32 1, %s6
  %s9 = scalar_select 0, %s8, %s6
  // Predicated region
  $region2: #{_net_forward_impl.1} parent=0 // pred_check
    _
  $region3: #{_net_forward_impl.1} parent=0 // pred_check_branch
    %11 = sbr.rel (0) target = $region5
  $region4: #{_net_forward_impl.1} parent=0 // pred_region
    _
  $region5: #{_net_forward_impl.1} parent=0 // pred_fallthru
    _
  // Predicated region
  $region6: #{_net_forward_impl.1} parent=0 // pred_check
    _
  $region7: #{_net_forward_impl.1} parent=0 // pred_check_branch
    %13 = sbr.rel (0) target = $region9
  $region8: #{_net_forward_impl.1} parent=0 // pred_region
    _
  $region9: #{_net_forward_impl.1} parent=0 // pred_fallthru
    _
  // Predicated region
  $region10: #{_net_forward_impl.1} parent=0 // pred_check
    _
  $region11: #{_net_forward_impl.1} parent=0 // pred_check_branch
    %15 = sbr.rel (0) target = $region13
  $region12: #{_net_forward_impl.1} parent=0 // pred_region
    _
  $region13: #{_net_forward_impl.1} parent=0 // pred_fallthru
    _
  // Predicated region
  $region14: #{_net_forward_impl.1} parent=0 // pred_check
    _
  $region15: #{_net_forward_impl.1} parent=0 // pred_check_branch
    %17 = sbr.rel (0) target = $region17
  $region16: #{_net_forward_impl.1} parent=0 // pred_region
    _
  $region17: #{_net_forward_impl.1} parent=0 // pred_fallthru
    _
  // Predicated region
  $region18: #{_net_forward_impl.1} parent=0 // pred_check
    _
  $region19: #{_net_forward_impl.1} parent=0 // pred_check_branch
    %19 = sbr.rel (0) target = $region21
  $region20: #{_net_forward_impl.1} parent=0 // pred_region
    _
  $region21: #{_net_forward_impl.1} parent=0 // pred_fallthru
    _
  %v20 = vld [vmem:[%s0] sm:$0xff]
  %v21 = vld [vmem:[%s4] sm:$0xff]
  %v22 = vld [vmem:[%s4 + $0x8] sm:$0xff]
  %v23 = vld [vmem:[%s4 + $0x10] sm:$0xff]
  %v24 = vld [vmem:[%s4 + $0x18] sm:$0xff]
  %v25 = vld [vmem:[%s4 + $0x20] sm:$0xff]
  %v26 = vld [vmem:[%s4 + $0x28] sm:$0xff]
  %v27 = vld [vmem:[%s4 + $0x30] sm:$0xff]
  %v28 = vld [vmem:[%s4 + $0x38] sm:$0xff]
  %v29 = vld [vmem:[%s1] sm:$0xff]
  %v30 = vld [vmem:[%s1 + $0x8] sm:$0xff]
  %v31 = vld [vmem:[%s1 + $0x10] sm:$0xff]
  %v32 = vld [vmem:[%s1 + $0x18] sm:$0xff]
  %v33 = vld [vmem:[%s1 + $0x20] sm:$0xff]
  %v34 = vld [vmem:[%s1 + $0x28] sm:$0xff]
  %v35 = vld [vmem:[%s1 + $0x30] sm:$0xff]
  %v36 = vld [vmem:[%s1 + $0x38] sm:$0xff]
  %38 = vset.pattern.permute.xlu0 0
  %39 = vperm.xlu0 %38, %v21
  %v40 = vpop.permute.xlu0 %39
  %43 = vset.pattern.permute.xlu0 0
  %44 = vperm.xlu0 %43, %v22
  %v45 = vpop.permute.xlu0 %44
  %48 = vset.pattern.permute.xlu0 0
  %49 = vperm.xlu0 %48, %v23
  %v50 = vpop.permute.xlu0 %49
  %53 = vset.pattern.permute.xlu0 0
  %54 = vperm.xlu0 %53, %v24
  %v55 = vpop.permute.xlu0 %54
  %58 = vset.pattern.permute.xlu0 0
  %59 = vperm.xlu0 %58, %v25
  %v60 = vpop.permute.xlu0 %59
  %63 = vset.pattern.permute.xlu0 0
  %64 = vperm.xlu0 %63, %v26
  %v65 = vpop.permute.xlu0 %64
  %68 = vset.pattern.permute.xlu0 0
  %69 = vperm.xlu0 %68, %v27
  %v70 = vpop.permute.xlu0 %69
  %73 = vset.pattern.permute.xlu0 0
  %74 = vperm.xlu0 %73, %v28
  %v75 = vpop.permute.xlu0 %74
  %vm77 = vcmask 64512
  %v79 = vsel %vm77, %v29, 0
  %v82 = vsel %vm77, %v30, 0
  %v85 = vsel %vm77, %v31, 0
  %v88 = vsel %vm77, %v32, 0
  %v91 = vsel %vm77, %v33, 0
  %v94 = vsel %vm77, %v34, 0
  %v97 = vsel %vm77, %v35, 0
  %v100 = vsel %vm77, %v36, 0
  %102 = vmatprep.subr.mxu0 0.0
  %103 = vmatpush1.msra.mxu0 0.0
  %104 = vmatprep.subr.mxu0 0.0
  %105 = vmatpush1.msra.mxu0 0.0
  %106 = vmatprep.subr.mxu0 0.0
  %107 = vmatpush1.msra.mxu0 0.0
  %108 = vmatprep.subr.mxu0 0.0
  %109 = vmatpush1.msra.mxu0 0.0
  %110 = vmatprep.subr.mxu0 0.0
  %111 = vmatpush1.msra.mxu0 0.0
  %112 = vmatprep.subr.mxu0 0.0
  %113 = vmatpush1.msra.mxu0 0.0
  %114 = vmatprep.subr.mxu0 0.0
  %115 = vmatpush1.msra.mxu0 0.0
  %116 = vmatprep.subr.mxu0 0.0
  %117 = vmatpush1.msra.mxu0 0.0
  %118 = vmatprep.subr.mxu0 0.0
  %119 = vmatpush1.msra.mxu0 0.0
  %120 = vmatprep.subr.mxu0 0.0
  %121 = vmatpush1.msra.mxu0 0.0
  %122 = vmatprep.subr.mxu0 0.0
  %123 = vmatpush1.msra.mxu0 0.0
  %124 = vmatprep.subr.mxu0 0.0
  %125 = vmatpush1.msra.mxu0 0.0
  %126 = vmatprep.subr.mxu0 0.0
  %127 = vmatpush1.msra.mxu0 0.0
  %128 = vmatprep.subr.mxu0 0.0
  %129 = vmatpush1.msra.mxu0 0.0
  %130 = vmatprep.subr.mxu0 0.0
  %131 = vmatpush1.msra.mxu0 0.0
  %132 = vmatprep.subr.mxu0 0.0
  %133 = vmatpush1.msra.mxu0 %v20
  %134 = vmatprep.subr.mxu0 0.0
  %135 = vmatpush2.msra.mxu0 0.0
  %136 = vmatprep.subr.mxu0 0.0
  %137 = vmatpush2.msra.mxu0 0.0
  %138 = vmatprep.subr.mxu0 0.0
  %139 = vmatpush2.msra.mxu0 0.0
  %140 = vmatprep.subr.mxu0 0.0
  %141 = vmatpush2.msra.mxu0 0.0
  %142 = vmatprep.subr.mxu0 0.0
  %143 = vmatpush2.msra.mxu0 0.0
  %144 = vmatprep.subr.mxu0 0.0
  %145 = vmatpush2.msra.mxu0 0.0
  %146 = vmatprep.subr.mxu0 0.0
  %147 = vmatpush2.msra.mxu0 0.0
  %148 = vmatprep.subr.mxu0 0.0
  %149 = vmatpush2.msra.mxu0 0.0
  %150 = vmatprep.subr.mxu0 0.0
  %151 = vmatpush2.msra.mxu0 0.0
  %152 = vmatprep.subr.mxu0 0.0
  %153 = vmatpush2.msra.mxu0 0.0
  %154 = vmatprep.subr.mxu0 0.0
  %155 = vmatpush2.msra.mxu0 0.0
  %156 = vmatprep.subr.mxu0 0.0
  %157 = vmatpush2.msra.mxu0 0.0
  %158 = vmatprep.subr.mxu0 0.0
  %159 = vmatpush2.msra.mxu0 0.0
  %160 = vmatprep.subr.mxu0 0.0
  %161 = vmatpush2.msra.mxu0 0.0
  %162 = vmatprep.subr.mxu0 0.0
  %163 = vmatpush2.msra.mxu0 0.0
  %164 = vmatprep.subr.mxu0 0.0
  %165 = vmatpush2.msra.mxu0 0.0
  %166 = vmatprep.mubr.f32.mxu0 0.0
  %167 = vmatmul.mubr.f32.gmra.mxu0 %v79
  %v168 = vpop.f32.mrf.mxu0
  %v169 = vadd.f32 %v40, %v168
  %v170 = vpop.f32.mrf.mxu0
  %171 = vmatprep.mubr.f32.mxu0 0.0
  %172 = vmatmul.mubr.f32.gmra.mxu0 %v82
  %v173 = vpop.f32.mrf.mxu0
  %v174 = vadd.f32 %v45, %v173
  %v175 = vpop.f32.mrf.mxu0
  %176 = vmatprep.mubr.f32.mxu0 0.0
  %177 = vmatmul.mubr.f32.gmra.mxu0 %v85
  %v178 = vpop.f32.mrf.mxu0
  %v179 = vadd.f32 %v50, %v178
  %v180 = vpop.f32.mrf.mxu0
  %181 = vmatprep.mubr.f32.mxu0 0.0
  %182 = vmatmul.mubr.f32.gmra.mxu0 %v88
  %v183 = vpop.f32.mrf.mxu0
  %v184 = vadd.f32 %v55, %v183
  %v185 = vpop.f32.mrf.mxu0
  %186 = vmatprep.mubr.f32.mxu0 0.0
  %187 = vmatmul.mubr.f32.gmra.mxu0 %v91
  %v188 = vpop.f32.mrf.mxu0
  %v189 = vadd.f32 %v60, %v188
  %v190 = vpop.f32.mrf.mxu0
  %191 = vmatprep.mubr.f32.mxu0 0.0
  %192 = vmatmul.mubr.f32.gmra.mxu0 %v94
  %v193 = vpop.f32.mrf.mxu0
  %v194 = vadd.f32 %v65, %v193
  %v195 = vpop.f32.mrf.mxu0
  %196 = vmatprep.mubr.f32.mxu0 0.0
  %197 = vmatmul.mubr.f32.gmra.mxu0 %v97
  %v198 = vpop.f32.mrf.mxu0
  %v199 = vadd.f32 %v70, %v198
  %v200 = vpop.f32.mrf.mxu0
  %201 = vmatprep.mubr.f32.mxu0 0.0
  %202 = vmatmul.mubr.f32.gmra.mxu0 %v100
  %v203 = vpop.f32.mrf.mxu0
  %v204 = vadd.f32 %v75, %v203
  %v205 = vpop.f32.mrf.mxu0
  %206 = vdwg.mxu0
  %v207 = vmax.f32 %v169, 0.0
  %v208 = vmax.f32 %v174, 0.0
  %v209 = vmax.f32 %v179, 0.0
  %v210 = vmax.f32 %v184, 0.0
  %v211 = vmax.f32 %v189, 0.0
  %v212 = vmax.f32 %v194, 0.0
  %v213 = vmax.f32 %v199, 0.0
  %v214 = vmax.f32 %v204, 0.0
  %v215 = vld [vmem:[%s2] sm:$0xff]
  %v216 = vld [vmem:[%s2 + $0x8] sm:$0xff]
  %v217 = vld [vmem:[%s2 + $0x10] sm:$0xff]
  %v218 = vld [vmem:[%s2 + $0x18] sm:$0xff]
  %v219 = vld [vmem:[%s2 + $0x20] sm:$0xff]
  %v220 = vld [vmem:[%s2 + $0x28] sm:$0xff]
  %v221 = vld [vmem:[%s2 + $0x30] sm:$0xff]
  %v222 = vld [vmem:[%s2 + $0x38] sm:$0xff]
  %223 = vset.pattern.permute.xlu0 1
  %224 = vperm.xlu0 %223, %v21
  %v225 = vpop.permute.xlu0 %224
  %227 = vset.pattern.permute.xlu0 1
  %228 = vperm.xlu0 %227, %v22
  %v229 = vpop.permute.xlu0 %228
  %231 = vset.pattern.permute.xlu0 1
  %232 = vperm.xlu0 %231, %v23
  %v233 = vpop.permute.xlu0 %232
  %235 = vset.pattern.permute.xlu0 1
  %236 = vperm.xlu0 %235, %v24
  %v237 = vpop.permute.xlu0 %236
  %239 = vset.pattern.permute.xlu0 1
  %240 = vperm.xlu0 %239, %v25
  %v241 = vpop.permute.xlu0 %240
  %243 = vset.pattern.permute.xlu0 1
  %244 = vperm.xlu0 %243, %v26
  %v245 = vpop.permute.xlu0 %244
  %247 = vset.pattern.permute.xlu0 1
  %248 = vperm.xlu0 %247, %v27
  %v249 = vpop.permute.xlu0 %248
  %251 = vset.pattern.permute.xlu0 1
  %252 = vperm.xlu0 %251, %v28
  %v253 = vpop.permute.xlu0 %252
  %vm255 = vcmask 523264
  %v257 = vsel %vm255, %v215, 0
  %v260 = vsel %vm255, %v216, 0
  %v263 = vsel %vm255, %v217, 0
  %v266 = vsel %vm255, %v218, 0
  %v269 = vsel %vm255, %v219, 0
  %v272 = vsel %vm255, %v220, 0
  %v275 = vsel %vm255, %v221, 0
  %v278 = vsel %vm255, %v222, 0
  %280 = vmatprep.subr.mxu0 0.0
  %281 = vmatpush1.msra.mxu0 0.0
  %282 = vmatprep.subr.mxu0 0.0
  %283 = vmatpush1.msra.mxu0 0.0
  %284 = vmatprep.subr.mxu0 0.0
  %285 = vmatpush1.msra.mxu0 0.0
  %286 = vmatprep.subr.mxu0 0.0
  %287 = vmatpush1.msra.mxu0 0.0
  %288 = vmatprep.subr.mxu0 0.0
  %289 = vmatpush1.msra.mxu0 0.0
  %290 = vmatprep.subr.mxu0 0.0
  %291 = vmatpush1.msra.mxu0 0.0
  %292 = vmatprep.subr.mxu0 0.0
  %293 = vmatpush1.msra.mxu0 0.0
  %294 = vmatprep.subr.mxu0 0.0
  %295 = vmatpush1.msra.mxu0 0.0
  %296 = vmatprep.subr.mxu0 0.0
  %297 = vmatpush1.msra.mxu0 %v214
  %298 = vmatprep.subr.mxu0 0.0
  %299 = vmatpush1.msra.mxu0 %v213
  %300 = vmatprep.subr.mxu0 0.0
  %301 = vmatpush1.msra.mxu0 %v212
  %302 = vmatprep.subr.mxu0 0.0
  %303 = vmatpush1.msra.mxu0 %v211
  %304 = vmatprep.subr.mxu0 0.0
  %305 = vmatpush1.msra.mxu0 %v210
  %306 = vmatprep.subr.mxu0 0.0
  %307 = vmatpush1.msra.mxu0 %v209
  %308 = vmatprep.subr.mxu0 0.0
  %309 = vmatpush1.msra.mxu0 %v208
  %310 = vmatprep.subr.mxu0 0.0
  %311 = vmatpush1.msra.mxu0 %v207
  %312 = vmatprep.subr.mxu0 0.0
  %313 = vmatpush2.msra.mxu0 0.0
  %314 = vmatprep.subr.mxu0 0.0
  %315 = vmatpush2.msra.mxu0 0.0
  %316 = vmatprep.subr.mxu0 0.0
  %317 = vmatpush2.msra.mxu0 0.0
  %318 = vmatprep.subr.mxu0 0.0
  %319 = vmatpush2.msra.mxu0 0.0
  %320 = vmatprep.subr.mxu0 0.0
  %321 = vmatpush2.msra.mxu0 0.0
  %322 = vmatprep.subr.mxu0 0.0
  %323 = vmatpush2.msra.mxu0 0.0
  %324 = vmatprep.subr.mxu0 0.0
  %325 = vmatpush2.msra.mxu0 0.0
  %326 = vmatprep.subr.mxu0 0.0
  %327 = vmatpush2.msra.mxu0 0.0
  %328 = vmatprep.subr.mxu0 0.0
  %329 = vmatpush2.msra.mxu0 0.0
  %330 = vmatprep.subr.mxu0 0.0
  %331 = vmatpush2.msra.mxu0 0.0
  %332 = vmatprep.subr.mxu0 0.0
  %333 = vmatpush2.msra.mxu0 0.0
  %334 = vmatprep.subr.mxu0 0.0
  %335 = vmatpush2.msra.mxu0 0.0
  %336 = vmatprep.subr.mxu0 0.0
  %337 = vmatpush2.msra.mxu0 0.0
  %338 = vmatprep.subr.mxu0 0.0
  %339 = vmatpush2.msra.mxu0 0.0
  %340 = vmatprep.subr.mxu0 0.0
  %341 = vmatpush2.msra.mxu0 0.0
  %342 = vmatprep.subr.mxu0 0.0
  %343 = vmatpush2.msra.mxu0 0.0
  %344 = vmatprep.mubr.f32.mxu0 0.0
  %345 = vmatmul.mubr.f32.gmra.mxu0 %v257
  %v346 = vpop.f32.mrf.mxu0
  %v347 = vadd.f32 %v225, %v346
  %v348 = vpop.f32.mrf.mxu0
  %349 = vmatprep.mubr.f32.mxu0 0.0
  %350 = vmatmul.mubr.f32.gmra.mxu0 %v260
  %v351 = vpop.f32.mrf.mxu0
  %v352 = vadd.f32 %v229, %v351
  %v353 = vpop.f32.mrf.mxu0
  %354 = vmatprep.mubr.f32.mxu0 0.0
  %355 = vmatmul.mubr.f32.gmra.mxu0 %v263
  %v356 = vpop.f32.mrf.mxu0
  %v357 = vadd.f32 %v233, %v356
  %v358 = vpop.f32.mrf.mxu0
  %359 = vmatprep.mubr.f32.mxu0 0.0
  %360 = vmatmul.mubr.f32.gmra.mxu0 %v266
  %v361 = vpop.f32.mrf.mxu0
  %v362 = vadd.f32 %v237, %v361
  %v363 = vpop.f32.mrf.mxu0
  %364 = vmatprep.mubr.f32.mxu0 0.0
  %365 = vmatmul.mubr.f32.gmra.mxu0 %v269
  %v366 = vpop.f32.mrf.mxu0
  %v367 = vadd.f32 %v241, %v366
  %v368 = vpop.f32.mrf.mxu0
  %369 = vmatprep.mubr.f32.mxu0 0.0
  %370 = vmatmul.mubr.f32.gmra.mxu0 %v272
  %v371 = vpop.f32.mrf.mxu0
  %v372 = vadd.f32 %v245, %v371
  %v373 = vpop.f32.mrf.mxu0
  %374 = vmatprep.mubr.f32.mxu0 0.0
  %375 = vmatmul.mubr.f32.gmra.mxu0 %v275
  %v376 = vpop.f32.mrf.mxu0
  %v377 = vadd.f32 %v249, %v376
  %v378 = vpop.f32.mrf.mxu0
  %379 = vmatprep.mubr.f32.mxu0 0.0
  %380 = vmatmul.mubr.f32.gmra.mxu0 %v278
  %v381 = vpop.f32.mrf.mxu0
  %v382 = vadd.f32 %v253, %v381
  %v383 = vpop.f32.mrf.mxu0
  %384 = vdwg.mxu0
  %v385 = vmax.f32 %v347, 0.0
  %v386 = vmax.f32 %v352, 0.0
  %v387 = vmax.f32 %v357, 0.0
  %v388 = vmax.f32 %v362, 0.0
  %v389 = vmax.f32 %v367, 0.0
  %v390 = vmax.f32 %v372, 0.0
  %v391 = vmax.f32 %v377, 0.0
  %v392 = vmax.f32 %v382, 0.0
  %v393 = vld [vmem:[%s3] sm:$0xff]
  %394 = vset.pattern.permute.xlu0 2
  %395 = vperm.xlu0 %394, %v21
  %v396 = vpop.permute.xlu0 %395
  %v399 = vsel %vm255, %v393, 0
  %401 = vmatprep.subr.mxu0 0.0
  %402 = vmatpush1.msra.mxu0 0.0
  %403 = vmatprep.subr.mxu0 0.0
  %404 = vmatpush1.msra.mxu0 0.0
  %405 = vmatprep.subr.mxu0 0.0
  %406 = vmatpush1.msra.mxu0 0.0
  %407 = vmatprep.subr.mxu0 0.0
  %408 = vmatpush1.msra.mxu0 0.0
  %409 = vmatprep.subr.mxu0 0.0
  %410 = vmatpush1.msra.mxu0 0.0
  %411 = vmatprep.subr.mxu0 0.0
  %412 = vmatpush1.msra.mxu0 0.0
  %413 = vmatprep.subr.mxu0 0.0
  %414 = vmatpush1.msra.mxu0 0.0
  %415 = vmatprep.subr.mxu0 0.0
  %416 = vmatpush1.msra.mxu0 0.0
  %417 = vmatprep.subr.mxu0 0.0
  %418 = vmatpush1.msra.mxu0 %v392
  %419 = vmatprep.subr.mxu0 0.0
  %420 = vmatpush1.msra.mxu0 %v391
  %421 = vmatprep.subr.mxu0 0.0
  %422 = vmatpush1.msra.mxu0 %v390
  %423 = vmatprep.subr.mxu0 0.0
  %424 = vmatpush1.msra.mxu0 %v389
  %425 = vmatprep.subr.mxu0 0.0
  %426 = vmatpush1.msra.mxu0 %v388
  %427 = vmatprep.subr.mxu0 0.0
  %428 = vmatpush1.msra.mxu0 %v387
  %429 = vmatprep.subr.mxu0 0.0
  %430 = vmatpush1.msra.mxu0 %v386
  %431 = vmatprep.subr.mxu0 0.0
  %432 = vmatpush1.msra.mxu0 %v385
  %433 = vmatprep.subr.mxu0 0.0
  %434 = vmatpush2.msra.mxu0 0.0
  %435 = vmatprep.subr.mxu0 0.0
  %436 = vmatpush2.msra.mxu0 0.0
  %437 = vmatprep.subr.mxu0 0.0
  %438 = vmatpush2.msra.mxu0 0.0
  %439 = vmatprep.subr.mxu0 0.0
  %440 = vmatpush2.msra.mxu0 0.0
  %441 = vmatprep.subr.mxu0 0.0
  %442 = vmatpush2.msra.mxu0 0.0
  %443 = vmatprep.subr.mxu0 0.0
  %444 = vmatpush2.msra.mxu0 0.0
  %445 = vmatprep.subr.mxu0 0.0
  %446 = vmatpush2.msra.mxu0 0.0
  %447 = vmatprep.subr.mxu0 0.0
  %448 = vmatpush2.msra.mxu0 0.0
  %449 = vmatprep.subr.mxu0 0.0
  %450 = vmatpush2.msra.mxu0 0.0
  %451 = vmatprep.subr.mxu0 0.0
  %452 = vmatpush2.msra.mxu0 0.0
  %453 = vmatprep.subr.mxu0 0.0
  %454 = vmatpush2.msra.mxu0 0.0
  %455 = vmatprep.subr.mxu0 0.0
  %456 = vmatpush2.msra.mxu0 0.0
  %457 = vmatprep.subr.mxu0 0.0
  %458 = vmatpush2.msra.mxu0 0.0
  %459 = vmatprep.subr.mxu0 0.0
  %460 = vmatpush2.msra.mxu0 0.0
  %461 = vmatprep.subr.mxu0 0.0
  %462 = vmatpush2.msra.mxu0 0.0
  %463 = vmatprep.subr.mxu0 0.0
  %464 = vmatpush2.msra.mxu0 0.0
  %465 = vmatprep.mubr.f32.mxu0 0.0
  %466 = vmatmul.mubr.f32.gmra.mxu0 %v399
  %v467 = vpop.f32.mrf.mxu0
  %v468 = vadd.f32 %v396, %v467
  %v469 = vpop.f32.mrf.mxu0
  %470 = vdwg.mxu0
  %471 = vst.msk [vmem:[%s5] sm:$0xff] %vm77, %v468
  // Predicated region
  $region22: #{_net_forward_impl.1} parent=0 // pred_check
    _
  $region23: #{_net_forward_impl.1} parent=0 // pred_check_branch
    %473 = sbr.rel (0) target = $region25
  $region24: #{_net_forward_impl.1} parent=0 // pred_region
    _
  $region25: #{_net_forward_impl.1} parent=0 // pred_fallthru
    _
  // Predicated region
  $region26: #{_net_forward_impl.1} parent=0 // pred_check
    _
  $region27: #{_net_forward_impl.1} parent=0 // pred_check_branch
    %475 = sbr.rel (0) target = $region29
  $region28: #{_net_forward_impl.1} parent=0 // pred_region
    _
  $region29: #{_net_forward_impl.1} parent=0 // pred_fallthru
    _

</llo_original>
